<compile_context>
chip_gen: v5e
topology: v5e:2x2
jax: 0.10.0
libtpu: 0.0.40
codegen_flags: <defaults>
</compile_context>

<pallas_src>
import functools

import jax
import jax.numpy as jnp
from jax.experimental import pallas as pl
from jax.experimental.pallas import tpu as pltpu


_CHUNK = 16                        # bf16 vreg sublane packing (also fine for f32)
_VMEM_LIMIT = 48 * 1024 * 1024     # needed on v5e; safe on v7x (64 MiB physical)
_PER_BLOCK_BUDGET = 12 * 1024 * 1024
_MAX_T_TILE = 1024


def _cdiv(a, b):
    return -(-a // b)


def _accumulate_time_tile(x_ref, acc_ref, valid_rows, *, t_tile, chunk,
                          may_be_ragged):
    """Accumulate one (b_tile, t_tile, H) time tile of x_ref into acc_ref.

    acc_ref: (b_tile, chunk, H) float32 scratch (cross-sublane reduce happens
    once, in the caller's epilogue).
    valid_rows: traced scalar = number of in-range frames in this tile
      (<= 0: tile entirely out of range; >= t_tile: fully valid).
    """
    assert t_tile % chunk == 0, "time tile must be a multiple of the fold chunk"
    n_chunks = t_tile // chunk
    inner = 4 if n_chunks % 4 == 0 else (2 if n_chunks % 2 == 0 else 1)
    n_outer = n_chunks // inner

    def run(masked):
        def body(i, carry):
            base0 = i * (inner * chunk)
            partial = None
            for j in range(inner):
                base = base0 + j * chunk
                if not isinstance(base, int):
                    base = pl.multiple_of(base, chunk)
                c = x_ref[:, pl.ds(base, chunk), :].astype(jnp.float32)
                if masked:
                    row = base + jax.lax.broadcasted_iota(jnp.int32, c.shape, 1)
                    c = jnp.where(row < valid_rows, c, 0.0)
                partial = c if partial is None else partial + c
            acc_ref[...] += partial
            return carry

        if n_outer == 1:
            body(0, 0)
        else:
            jax.lax.fori_loop(0, n_outer, body, 0, unroll=min(n_outer, 4))

    if not may_be_ragged:
        run(masked=False)
    else:
        @pl.when(valid_rows >= t_tile)
        def _():
            run(masked=False)

        @pl.when(jnp.logical_and(valid_rows > 0, valid_rows < t_tile))
        def _():
            run(masked=True)


def _fused_pool_mlp_kernel(x_ref, w1_ref, b1_ref, w2_ref, b2_ref, out_ref,
                           acc_ref, *, t_tile, chunk, total_t, ragged):
    """Grid = (batch blocks [parallel], time blocks [arbitrary reduction])."""
    t = pl.program_id(1)

    @pl.when(t == 0)
    def _():
        acc_ref[...] = jnp.zeros_like(acc_ref)

    valid = total_t - t * t_tile
    _accumulate_time_tile(x_ref, acc_ref, valid, t_tile=t_tile, chunk=chunk,
                          may_be_ragged=ragged)

    @pl.when(t == pl.num_programs(1) - 1)
    def _():
        # Mean over the true (unpadded) number of frames.
        pooled = jnp.sum(acc_ref[...], axis=1) * jnp.float32(1.0 / total_t)
        # Linear(H, 256) + ReLU; Dropout(0.4) is identity at inference.
        h = jnp.dot(pooled, w1_ref[...],
                    preferred_element_type=jnp.float32) + b1_ref[...]
        h = jnp.maximum(h, 0.0)
        # Linear(256, num_classes)
        logits = jnp.dot(h, w2_ref[...],
                         preferred_element_type=jnp.float32) + b2_ref[...]
        out_ref[...] = logits.astype(out_ref.dtype)


def _partial_time_sum_kernel(x_ref, out_ref, acc_ref, *, t_tile, chunk,
                             total_t, blocks_per_split):
    """Grid = (time split [parallel, feeds v7x's 2nd TC], time blocks)."""
    s = pl.program_id(0)
    t = pl.program_id(1)

    @pl.when(t == 0)
    def _():
        acc_ref[...] = jnp.zeros_like(acc_ref)

    tb = s * blocks_per_split + t          # overall time-block index (unclamped)
    valid = total_t - tb * t_tile          # <=0 for the duplicated overflow block
    _accumulate_time_tile(x_ref, acc_ref, valid, t_tile=t_tile, chunk=chunk,
                          may_be_ragged=True)

    @pl.when(t == pl.num_programs(1) - 1)
    def _():
        out_ref[...] = jnp.sum(acc_ref[...], axis=1)[None, :, :]


def _pool_mlp_kernel(part_ref, w1_ref, b1_ref, w2_ref, b2_ref, out_ref, *,
                     total_t):
    """Tiny epilogue: combine per-split time sums, mean, 2-layer MLP."""
    pooled = jnp.sum(part_ref[...], axis=0) * jnp.float32(1.0 / total_t)
    h = jnp.dot(pooled, w1_ref[...],
                preferred_element_type=jnp.float32) + b1_ref[...]
    h = jnp.maximum(h, 0.0)
    logits = jnp.dot(h, w2_ref[...],
                     preferred_element_type=jnp.float32) + b2_ref[...]
    out_ref[...] = logits.astype(out_ref.dtype)


def wav2vec_regional_classifier_head(hidden_states, w1, b1, w2, b2, *,
                                     t_tile=None):
    """hidden_states: (B, T, H) float (f32 or bf16).  Returns (B, C) f32 logits.

    No dtype cast and no time padding happens here: either would add a full
    extra HBM pass over the (B, T, H) activations, which dominate this
    bandwidth-bound computation.  Accumulation inside the kernel is float32.
    """
    B, T, H = hidden_states.shape
    MID = w1.shape[1]
    C = w2.shape[1]
    itemsize = jnp.dtype(hidden_states.dtype).itemsize

    # Batch tiling: 8-row blocks (layout-legal for the (b_tile, C) output) when
    # that yields >= 2 blocks for megacore batch parallelism.
    b_tile = 8 if (B % 8 == 0 and B > 8) else B
    n_bb = B // b_tile

    # Time tiling: multiples of 16 (bf16 sublane packing), capped so one
    # double-buffered activation block stays within ~12 MiB, and never larger
    # than the array (ragged last tile is masked in-kernel, never padded).
    if T >= _CHUNK:
        chunk = _CHUNK
        cap = _PER_BLOCK_BUDGET // (b_tile * H * itemsize)
        cap = max(chunk, min(cap, _MAX_T_TILE, (T // chunk) * chunk))
        cap = (cap // chunk) * chunk
        if t_tile is None:
            t_tile = cap
        else:
            t_tile = max(chunk, min((t_tile // chunk) * chunk, cap))
    else:
        chunk = T
        t_tile = T
    n_tb = _cdiv(T, t_tile)
    ragged = (T % t_tile) != 0

    compiler_params = pltpu.CompilerParams(
        dimension_semantics=("parallel", "arbitrary"),
        vmem_limit_bytes=_VMEM_LIMIT,
    )

    # When batch parallelism is absent but there are several time blocks, split
    # the time range over a leading "parallel" axis so a 2nd TensorCore (v7x)
    # gets half the HBM stream.  Harmless (serialized) on 1-TC chips.
    use_split = (n_bb == 1) and (n_tb >= 2)

    if not use_split:
        kernel = functools.partial(
            _fused_pool_mlp_kernel, t_tile=t_tile, chunk=chunk, total_t=T,
            ragged=ragged)
        return pl.pallas_call(
            kernel,
            out_shape=jax.ShapeDtypeStruct((B, C), jnp.float32),
            grid_spec=pltpu.PrefetchScalarGridSpec(
                num_scalar_prefetch=0,
                grid=(n_bb, n_tb),
                in_specs=[
                    pl.BlockSpec((b_tile, t_tile, H), lambda b, t: (b, t, 0)),
                    pl.BlockSpec((H, MID), lambda b, t: (0, 0)),
                    pl.BlockSpec((1, MID), lambda b, t: (0, 0)),
                    pl.BlockSpec((MID, C), lambda b, t: (0, 0)),
                    pl.BlockSpec((1, C), lambda b, t: (0, 0)),
                ],
                out_specs=pl.BlockSpec((b_tile, C), lambda b, t: (b, 0)),
                scratch_shapes=[pltpu.VMEM((b_tile, chunk, H), jnp.float32)],
            ),
            compiler_params=compiler_params,
        )(hidden_states, w1, b1, w2, b2)

    # ---- split path: per-split partial time sums, then a tiny MLP kernel ----
    n_split = 2
    bps = _cdiv(n_tb, n_split)
    if n_split * bps > n_tb:
        # Odd number of time blocks: split 1's last iteration duplicates the
        # final block (clamped index); the kernel skips it via valid <= 0.
        def x_time_index(s, t):
            return jnp.minimum(s * bps + t, n_tb - 1)
    else:
        def x_time_index(s, t):
            return s * bps + t

    partial_kernel = functools.partial(
        _partial_time_sum_kernel, t_tile=t_tile, chunk=chunk, total_t=T,
        blocks_per_split=bps)
    partials = pl.pallas_call(
        partial_kernel,
        out_shape=jax.ShapeDtypeStruct((n_split, B, H), jnp.float32),
        grid_spec=pltpu.PrefetchScalarGridSpec(
            num_scalar_prefetch=0,
            grid=(n_split, bps),
            in_specs=[
                pl.BlockSpec((B, t_tile, H),
                             lambda s, t: (0, x_time_index(s, t), 0)),
            ],
            out_specs=pl.BlockSpec((1, B, H), lambda s, t: (s, 0, 0)),
            scratch_shapes=[pltpu.VMEM((B, chunk, H), jnp.float32)],
        ),
        compiler_params=compiler_params,
    )(hidden_states)

    mlp_kernel = functools.partial(_pool_mlp_kernel, total_t=T)
    return pl.pallas_call(
        mlp_kernel,
        out_shape=jax.ShapeDtypeStruct((B, C), jnp.float32),
        grid_spec=pltpu.PrefetchScalarGridSpec(
            num_scalar_prefetch=0,
            grid=(1,),
            in_specs=[
                pl.BlockSpec((n_split, B, H), lambda i: (0, 0, 0)),
                pl.BlockSpec((H, MID), lambda i: (0, 0)),
                pl.BlockSpec((1, MID), lambda i: (0, 0)),
                pl.BlockSpec((MID, C), lambda i: (0, 0)),
                pl.BlockSpec((1, C), lambda i: (0, 0)),
            ],
            out_specs=pl.BlockSpec((B, C), lambda i: (0, 0)),
        ),
        compiler_params=pltpu.CompilerParams(
            dimension_semantics=("arbitrary",)),
    )(partials, w1, b1, w2, b2)


def _reference(hidden_states, w1, b1, w2, b2):
    pooled = hidden_states.mean(axis=1)
    h = jnp.maximum(pooled @ w1 + b1[0], 0.0)
    return h @ w2 + b2[0]


if __name__ == "__main__":
    key = jax.random.PRNGKey(0)
    k_x, k_w1, k_b1, k_w2, k_b2 = jax.random.split(key, 5)

    # H=hidden_size (768 in the real model, 32 here), MID=256, C=14 classes.
    H, MID, C = 32, 256, 14
    w1 = jax.random.normal(k_w1, (H, MID), dtype=jnp.float32) * (1.0 / H ** 0.5)
    b1 = jax.random.normal(k_b1, (1, MID), dtype=jnp.float32) * 0.01
    w2 = jax.random.normal(k_w2, (MID, C), dtype=jnp.float32) * (1.0 / MID ** 0.5)
    b2 = jax.random.normal(k_b2, (1, C), dtype=jnp.float32) * 0.01

    # (B, T, activation dtype, t_tile) -- exercise fused / split / ragged paths.
    cases = [
        (2, 40, jnp.float32, None),    # split path, ragged last tile (masked)
        (2, 40, jnp.float32, 16),      # split path, odd #time blocks (clamped)
        (16, 24, jnp.float32, 16),     # fused path, 2 batch blocks, ragged tail
        (2, 16, jnp.bfloat16, None),   # bf16 activations straight from backbone
    ]
    for (B, T, act_dtype, tt) in cases:
        x = jax.random.normal(k_x, (B, T, H), dtype=jnp.float32).astype(act_dtype)
        logits = wav2vec_regional_classifier_head(x, w1, b1, w2, b2, t_tile=tt)
        logits = jax.block_until_ready(logits)
        ref = _reference(x.astype(jnp.float32), w1, b1, w2, b2)
        assert logits.shape == (B, C)
        tol = 2e-2 if act_dtype == jnp.bfloat16 else 2e-3
        err = float(jnp.max(jnp.abs(logits - ref)))
        assert jnp.allclose(logits, ref, atol=tol, rtol=tol), (B, T, tt, err)

    print("KERNEL_OK")
</pallas_src>

<mosaic_0001>
module attributes {stable_mosaic.version = 11 : i64} {
  func.func @_partial_time_sum_kernel(%arg0: i32, %arg1: i32, %arg2: memref<2x32x32xf32, #tpu.memory_space<vmem>>, %arg3: memref<1x2x32xf32, #tpu.memory_space<vmem>>, %arg4: memref<2x16x32xf32, #tpu.memory_space<vmem>>) attributes {dimension_semantics = [#tpu.dimension_semantics<parallel>, #tpu.dimension_semantics<arbitrary>], iteration_bounds = array<i64: 2, 1>, scalar_prefetch = 0 : i64, scratch_operands = 1 : i64, tpu.core_type = #tpu.core_type<tc>, window_params = [{transform_indices = @transform_0, window_bounds = array<i64: 2, 32, 32>}, {transform_indices = @transform_1, window_bounds = array<i64: 1, 2, 32>}]} {
    %c0_i32 = arith.constant 0 : i32
    %0 = arith.cmpi eq, %arg1, %c0_i32 : i32
    %1 = arith.extui %0 : i1 to i32
    %c0_i32_0 = arith.constant 0 : i32
    %2 = arith.cmpi ne, %1, %c0_i32_0 : i32
    scf.if %2 {
      %cst = arith.constant 0.000000e+00 : f32
      %18 = vector.broadcast %cst : f32 to vector<2x16x32xf32>
      %c0 = arith.constant 0 : index
      %c0_8 = arith.constant 0 : index
      %c0_9 = arith.constant 0 : index
      %19 = vector.load %arg4[%c0, %c0_8, %c0_9] : memref<2x16x32xf32, #tpu.memory_space<vmem>>, vector<2x16x32xf32>
      tpu.vector_store %arg4[%c0, %c0_8, %c0_9], %18 {strides = array<i32>} : memref<2x16x32xf32, #tpu.memory_space<vmem>>, vector<2x16x32xf32>,
    } else {
    }
    %c1_i32 = arith.constant 1 : i32
    %3 = arith.muli %arg0, %c1_i32 : i32
    %4 = arith.addi %3, %arg1 : i32
    %c32_i32 = arith.constant 32 : i32
    %5 = arith.muli %4, %c32_i32 : i32
    %c40_i32 = arith.constant 40 : i32
    %6 = arith.subi %c40_i32, %5 : i32
    %c32_i32_1 = arith.constant 32 : i32
    %7 = arith.cmpi sge, %6, %c32_i32_1 : i32
    %8 = arith.extui %7 : i1 to i32
    %c0_i32_2 = arith.constant 0 : i32
    %9 = arith.cmpi ne, %8, %c0_i32_2 : i32
    scf.if %9 {
      %c0 = arith.constant 0 : index
      %c0_8 = arith.constant 0 : index
      %c0_9 = arith.constant 0 : index
      %18 = vector.load %arg2[%c0, %c0_8, %c0_9] : memref<2x32x32xf32, #tpu.memory_space<vmem>>, vector<2x16x32xf32>
      %c0_10 = arith.constant 0 : index
      %c16 = arith.constant 16 : index
      %c0_11 = arith.constant 0 : index
      %19 = vector.load %arg2[%c0_10, %c16, %c0_11] : memref<2x32x32xf32, #tpu.memory_space<vmem>>, vector<2x16x32xf32>
      %20 = arith.addf %18, %19 : vector<2x16x32xf32>
      %c0_12 = arith.constant 0 : index
      %c0_13 = arith.constant 0 : index
      %c0_14 = arith.constant 0 : index
      %21 = vector.load %arg4[%c0_12, %c0_13, %c0_14] : memref<2x16x32xf32, #tpu.memory_space<vmem>>, vector<2x16x32xf32>
      %22 = arith.addf %21, %20 : vector<2x16x32xf32>
      %c0_15 = arith.constant 0 : index
      %c0_16 = arith.constant 0 : index
      %c0_17 = arith.constant 0 : index
      %23 = vector.load %arg4[%c0_15, %c0_16, %c0_17] : memref<2x16x32xf32, #tpu.memory_space<vmem>>, vector<2x16x32xf32>
      tpu.vector_store %arg4[%c0_15, %c0_16, %c0_17], %22 {strides = array<i32>} : memref<2x16x32xf32, #tpu.memory_space<vmem>>, vector<2x16x32xf32>,
    } else {
    }
    %c0_i32_3 = arith.constant 0 : i32
    %10 = arith.cmpi sgt, %6, %c0_i32_3 : i32
    %c32_i32_4 = arith.constant 32 : i32
    %11 = arith.cmpi slt, %6, %c32_i32_4 : i32
    %12 = arith.andi %10, %11 : i1
    %13 = arith.extui %12 : i1 to i32
    %c0_i32_5 = arith.constant 0 : i32
    %14 = arith.cmpi ne, %13, %c0_i32_5 : i32
    scf.if %14 {
      %c0 = arith.constant 0 : index
      %c0_8 = arith.constant 0 : index
      %c0_9 = arith.constant 0 : index
      %18 = vector.load %arg2[%c0, %c0_8, %c0_9] : memref<2x32x32xf32, #tpu.memory_space<vmem>>, vector<2x16x32xf32>
      %19 = tpu.iota {dimensions = array<i32: 1>} : vector<2x16x32xi32>
      %c0_i32_10 = arith.constant 0 : i32
      %20 = vector.broadcast %c0_i32_10 : i32 to vector<2x16x32xi32>
      %21 = arith.addi %20, %19 : vector<2x16x32xi32>
      %22 = vector.broadcast %6 : i32 to vector<2x16x32xi32>
      %23 = arith.cmpi slt, %21, %22 : vector<2x16x32xi32>
      %cst = arith.constant 0.000000e+00 : f32
      %24 = vector.broadcast %cst : f32 to vector<2x16x32xf32>
      %25 = arith.select %23, %18, %24 : vector<2x16x32xi1>, vector<2x16x32xf32>
      %c0_11 = arith.constant 0 : index
      %c16 = arith.constant 16 : index
      %c0_12 = arith.constant 0 : index
      %26 = vector.load %arg2[%c0_11, %c16, %c0_12] : memref<2x32x32xf32, #tpu.memory_space<vmem>>, vector<2x16x32xf32>
      %27 = tpu.iota {dimensions = array<i32: 1>} : vector<2x16x32xi32>
      %c16_i32 = arith.constant 16 : i32
      %28 = vector.broadcast %c16_i32 : i32 to vector<2x16x32xi32>
      %29 = arith.addi %28, %27 : vector<2x16x32xi32>
      %30 = vector.broadcast %6 : i32 to vector<2x16x32xi32>
      %31 = arith.cmpi slt, %29, %30 : vector<2x16x32xi32>
      %cst_13 = arith.constant 0.000000e+00 : f32
      %32 = vector.broadcast %cst_13 : f32 to vector<2x16x32xf32>
      %33 = arith.select %31, %26, %32 : vector<2x16x32xi1>, vector<2x16x32xf32>
      %34 = arith.addf %25, %33 : vector<2x16x32xf32>
      %c0_14 = arith.constant 0 : index
      %c0_15 = arith.constant 0 : index
      %c0_16 = arith.constant 0 : index
      %35 = vector.load %arg4[%c0_14, %c0_15, %c0_16] : memref<2x16x32xf32, #tpu.memory_space<vmem>>, vector<2x16x32xf32>
      %36 = arith.addf %35, %34 : vector<2x16x32xf32>
      %c0_17 = arith.constant 0 : index
      %c0_18 = arith.constant 0 : index
      %c0_19 = arith.constant 0 : index
      %37 = vector.load %arg4[%c0_17, %c0_18, %c0_19] : memref<2x16x32xf32, #tpu.memory_space<vmem>>, vector<2x16x32xf32>
      tpu.vector_store %arg4[%c0_17, %c0_18, %c0_19], %36 {strides = array<i32>} : memref<2x16x32xf32, #tpu.memory_space<vmem>>, vector<2x16x32xf32>,
    } else {
    }
    %c0_i32_6 = arith.constant 0 : i32
    %15 = arith.cmpi eq, %arg1, %c0_i32_6 : i32
    %16 = arith.extui %15 : i1 to i32
    %c0_i32_7 = arith.constant 0 : i32
    %17 = arith.cmpi ne, %16, %c0_i32_7 : i32
    scf.if %17 {
      %c0 = arith.constant 0 : index
      %c0_8 = arith.constant 0 : index
      %c0_9 = arith.constant 0 : index
      %18 = vector.load %arg4[%c0, %c0_8, %c0_9] : memref<2x16x32xf32, #tpu.memory_space<vmem>>, vector<2x16x32xf32>
      %cst = arith.constant dense<0.000000e+00> : vector<2x32xf32>
      %19 = vector.multi_reduction <add>, %18, %cst [1] : vector<2x16x32xf32> to vector<2x32xf32>
      %20 = vector.shape_cast %19 : vector<2x32xf32> to vector<1x2x32xf32>
      %c0_10 = arith.constant 0 : index
      %c0_11 = arith.constant 0 : index
      %c0_12 = arith.constant 0 : index
      %21 = vector.load %arg3[%c0_10, %c0_11, %c0_12] : memref<1x2x32xf32, #tpu.memory_space<vmem>>, vector<1x2x32xf32>
      tpu.vector_store %arg3[%c0_10, %c0_11, %c0_12], %20 {strides = array<i32>} : memref<1x2x32xf32, #tpu.memory_space<vmem>>, vector<1x2x32xf32>,
    } else {
    }
    return
  }
  func.func @transform_0(%arg0: i32, %arg1: i32) -> (i32, i32, i32) {
    %c1_i32 = arith.constant 1 : i32
    %0 = arith.muli %arg0, %c1_i32 : i32
    %1 = arith.addi %0, %arg1 : i32
    %c0_i32 = arith.constant 0 : i32
    %c0_i32_0 = arith.constant 0 : i32
    %c0_i32_1 = arith.constant 0 : i32
    return %c0_i32, %1, %c0_i32_0 : i32, i32, i32
  }
  func.func @transform_1(%arg0: i32, %arg1: i32) -> (i32, i32, i32) {
    %c0_i32 = arith.constant 0 : i32
    %c0_i32_0 = arith.constant 0 : i32
    %c0_i32_1 = arith.constant 0 : i32
    return %arg0, %c0_i32, %c0_i32_0 : i32, i32, i32
  }
}

</mosaic_0001>

<llo_original>
// kernel: tpu_custom_call.1
$region0: #{tpu_custom_call.1}
  #allocation0 [shape = 'u32[]', space=smem, size = 0x4, offset = 0x4, fixed_abs, tag = 'smem constant byte address 0x4 - core index']
  #allocation1 [shape = 'u32[72,128]{1,0:T(1,128)}', space=vmem, size = 0x9000, scoped, tag = 'internal scratch']
  #allocation2 [shape = 'f32[2,16,32]{2,1,0:T(8,128)}', space=vmem, size = 0x4000, scoped, tag = 'scratch operand']
  %s0 = inlined_call_operand.vmem [shape: f32[2,40,32], index: 0, kind: input, shape index: {}]
  %s1 = inlined_call_operand.hbm [shape: f32[2,2,32], index: 1, kind: output, shape index: {}]
  %s2 = sld [smem:[#allocation0]]
  $region105: #{tpu_custom_call.1} parent=0
    _
  %s4 = ssub.s32 1, %s2
  %s5 = scalar_select 0, %s4, %s2
  $region1: #{tpu_custom_call.1} parent=0
    #allocation3 [shape = 'u8[65536]{0}', space=vmem, size = 0x10000, scoped, tag = 'input window, operand 0']
    #allocation4 [shape = 'u8[2048]{0}', space=vmem, size = 0x800, scoped, tag = 'output window, operand 0']
    #allocation5 [shape = 's32[2]{0}', space=sflag, size = 0x8, scoped, tag = 'scoped memory for tpu_custom_call.1']
    %6 = vsyncpa [#allocation5], 0
    %s7 = scalar_lea.sflag [#allocation5], 1
    %8 = vsyncpa %s7, 0
    loop: start=0, step=1, limit=4
    $region2: #{tpu_custom_call.1} parent=1 // loop_pre_header
      _
    $region3: #{tpu_custom_call.1} parent=1 // loop_header
      %s10 = sphi 0, %s14
      %p11 = scmp.ge.s32.totalorder %s10, 4
      %s17 = sphi 0, %s29
      %s18 = sphi 0, %s25
      %s19 = sphi 0, %s17
      %s20 = sphi 0, %s18
      %s21 = sphi 0, %s19
      %s22 = sphi 0, %s20
      %s34 = sphi 0, %s36
      %s37 = sphi 0, %s34
      %s38 = sphi 0, %s37
      %s54 = sphi 0, %s38
      %s60 = sphi 0, %s62
      %s63 = sphi 0, %s60
      %s64 = sphi 0, %s63
      %s80 = sphi 0, %s64
    $region4: #{tpu_custom_call.1} parent=1 // loop_header_branch
      %13 = sbr.rel (%p11) target = $region8
    $region5: #{tpu_custom_call.1} parent=1 // loop_body
      %s15 = ssub.s32 %s10, 1
      %s16 = ssub.s32 %s10, 2
      %s23 = sadd.s32 1, %s18
      %p24 = scmp.ge.s32.totalorder %s23, 1
      %s25 = scalar_select %p24, 0, %s23
      %s26 = sadd.s32 1, %s17
      %s27 = scalar_select %p24, %s26, %s17
      %p28 = scmp.ge.s32.totalorder %s27, 2
      %s29 = scalar_select %p28, 0, %s27
      %s30 = sadd.s32 %s17, %s18
      %s31 = sadd.s32 %s29, %s25
      %s32 = ssub.s32 %s30, %s31
      %p33 = scmp.eq.s32.totalorder %s32, 0
      %s35 = sadd.s32 %s34, 1
      %s36 = scalar_select %p33, %s34, %s35
      %p39 = pneg %p33
      %p40 = scmp.eq.s32.totalorder %s10, 1
      %p41 = por %p39, %p40
      %p42 = scmp.ne.s32.totalorder %s34, %s37
      %p43 = scmp.eq.s32.totalorder %s10, 0
      %p44 = por %p42, %p43
      %p45 = scmp.ne.s32.totalorder %s34, %s37
      %p46 = scmp.eq.s32.totalorder %s15, 1
      %p47 = por %p45, %p46
      %p48 = scmp.ne.s32.totalorder %s37, %s38
      %p49 = scmp.eq.s32.totalorder %s15, 0
      %p50 = por %p48, %p49
      %p51 = scmp.ne.s32.totalorder %s37, %s38
      %p52 = scmp.eq.s32.totalorder %s16, 1
      %p53 = por %p51, %p52
      %p55 = scmp.ne.s32.totalorder %s38, %s54
      %p56 = scmp.eq.s32.totalorder %s16, 0
      %p57 = por %p55, %p56
      %s58 = ssub.s32 %s17, %s29
      %p59 = scmp.eq.s32.totalorder %s58, 0
      %s61 = sadd.s32 %s60, 1
      %s62 = scalar_select %p59, %s60, %s61
      %p65 = pneg %p59
      %p66 = scmp.eq.s32.totalorder %s10, 1
      %p67 = por %p65, %p66
      %p68 = scmp.ne.s32.totalorder %s60, %s63
      %p69 = scmp.eq.s32.totalorder %s10, 0
      %p70 = por %p68, %p69
      %p71 = scmp.ne.s32.totalorder %s60, %s63
      %p72 = scmp.eq.s32.totalorder %s15, 1
      %p73 = por %p71, %p72
      %p74 = scmp.ne.s32.totalorder %s63, %s64
      %p75 = scmp.eq.s32.totalorder %s15, 0
      %p76 = por %p74, %p75
      %p77 = scmp.ne.s32.totalorder %s63, %s64
      %p78 = scmp.eq.s32.totalorder %s16, 1
      %p79 = por %p77, %p78
      %p81 = scmp.ne.s32.totalorder %s64, %s80
      %p82 = scmp.eq.s32.totalorder %s16, 0
      %p83 = por %p81, %p82
      %p84 = scmp.le.s32.totalorder 1, %s10
      %p85 = scmp.lt.s32.totalorder %s10, 3
      %p86 = pnand %p84, %p85
      %p87 = pneg %p86
      // Predicated region
      $region9: #{tpu_custom_call.1} parent=5 // pred_check
        _
      $region10: #{tpu_custom_call.1} parent=5 // pred_check_branch
        %89 = sbr.rel (%p86) target = $region12
      $region11: #{tpu_custom_call.1} parent=5 // pred_region
        %s90 = ssub.s32 %s10, 1
      $region12: #{tpu_custom_call.1} parent=5 // pred_fallthru
        _
      %p91 = scmp.lt.s32.totalorder %s10, 2
      // Predicated region
      $region13: #{tpu_custom_call.1} parent=5 // pred_check
        %p92 = pneg %p91
      $region14: #{tpu_custom_call.1} parent=5 // pred_check_branch
        %94 = sbr.rel (%p92) target = $region16
      $region15: #{tpu_custom_call.1} parent=5 // pred_region
        // Predicated region
        $region17: #{tpu_custom_call.1} parent=15 // pred_check
          %p95 = pneg %p44
        $region18: #{tpu_custom_call.1} parent=15 // pred_check_branch
          %97 = sbr.rel (%p95) target = $region20
        $region19: #{tpu_custom_call.1} parent=15 // pred_region
          %s98 = sand.u32 %s34, 1
          %s99 = sand.u32 %s34, 1
          %s100 = smul.addr %s99, 64
          %s101 = scalar_lea.vmem [#allocation3], %s100
          %s102 = sadd.s32 %s17, %s18
          %s103 = smul.u32 4, %s102
          %s104 = ssub.s32 5, %s103
          %p105 = scmp.lt.s32.totalorder %s104, 4
          %s106 = scalar_select %p105, %s104, 4
          %s107 = smul.u32 16, %s106
          %p108 = scmp.ne.s32.totalorder 0, %s107
          %s109 = smul.addr %s103, 8
          %s110 = scalar_lea.vmem %s0, %s109
          // Predicated region
          $region21: #{tpu_custom_call.1} parent=19 // pred_check
            %p111 = pneg %p108
          $region22: #{tpu_custom_call.1} parent=19 // pred_check_branch
            %113 = sbr.rel (%p111) target = $region24
          $region23: #{tpu_custom_call.1} parent=19 // pred_region
            // Predicated region
            $region25: #{tpu_custom_call.1} parent=23 // pred_check
              _
            $region26: #{tpu_custom_call.1} parent=23 // pred_check_branch
              %115 = sbr.rel (0) target = $region28
            $region27: #{tpu_custom_call.1} parent=23 // pred_region
              // Predicated region
              $region47: #{tpu_custom_call.1} parent=27 // pred_check
                _
              $region48: #{tpu_custom_call.1} parent=27 // pred_check_branch
                %181 = sbr.rel (0) target = $region50
              $region49: #{tpu_custom_call.1} parent=27 // pred_region
                %s182 = sshrl.u32 %s106, 2
                // While loop
                $region51: #{tpu_custom_call.1} parent=49 // loop_pre_header
                  _
                $region52: #{tpu_custom_call.1} parent=49 // loop_header
                  %s184 = sphi 0, %s186
                  %p185 = scmp.ge.s32.totalorder %s184, %s182
                  %s189 = sphi 0, %s210
                  %s190 = sphi %s110, %s213
                  %s191 = sphi %s101, %s214
                $region53: #{tpu_custom_call.1} parent=49 // loop_header_branch
                  %188 = sbr.rel (%p185) target = $region57
                $region54: #{tpu_custom_call.1} parent=49 // loop_body
                  %v192 = vld [vmem:[%s190] sm:$0xff]
                  %193 = vst [vmem:[%s191] sm:$0xff] %v192
                  %v194 = vld [vmem:[%s190 + $0x8] sm:$0xff]
                  %195 = vst [vmem:[%s191 + $0x8] sm:$0xff] %v194
                  %v196 = vld [vmem:[%s190 + $0x10] sm:$0xff]
                  %197 = vst [vmem:[%s191 + $0x10] sm:$0xff] %v196
                  %v198 = vld [vmem:[%s190 + $0x18] sm:$0xff]
                  %199 = vst [vmem:[%s191 + $0x18] sm:$0xff] %v198
                  %v200 = vld [vmem:[%s190 + $0x28] sm:$0xff]
                  %201 = vst [vmem:[%s191 + $0x20] sm:$0xff] %v200
                  %v202 = vld [vmem:[%s190 + $0x30] sm:$0xff]
                  %203 = vst [vmem:[%s191 + $0x28] sm:$0xff] %v202
                  %v204 = vld [vmem:[%s190 + $0x38] sm:$0xff]
                  %205 = vst [vmem:[%s191 + $0x30] sm:$0xff] %v204
                  %v206 = vld [vmem:[%s190 + $0x40] sm:$0xff]
                  %207 = vst [vmem:[%s191 + $0x38] sm:$0xff] %v206
                  %s208 = sadd.s32 1, %s189
                  %p209 = scmp.ge.s32.totalorder %s208, %s182
                  %s210 = scalar_select %p209, 0, %s208
                  %s211 = smul.u32 %s210, 32
                  %s212 = smul.u32 %s210, 32
                  %s213 = scalar_lea.vmem %s110, %s211
                  %s214 = scalar_lea.vmem %s101, %s212 [#allocation3]
                $region55: #{tpu_custom_call.1} parent=49 // loop_footer
                  %s186 = sadd.s32 %s184, 1
                $region56: #{tpu_custom_call.1} parent=49 // loop_footer_branch
                  %183 = sbr.rel target = $region52
                $region57: #{tpu_custom_call.1} parent=49 // loop_exit
                  _
                %s215 = sshrl.u32 %s106, 2
                %s216 = sand.u32 %s106, 3
                %s217 = smul.u32 %s215, 4
                %s218 = smul.u32 8, %s217
                %s219 = scalar_lea.vmem %s110, %s218
                %s220 = smul.u32 8, %s217
                %s221 = scalar_lea.vmem %s101, %s220 [#allocation3]
                // While loop
                $region58: #{tpu_custom_call.1} parent=49 // loop_pre_header
                  _
                $region59: #{tpu_custom_call.1} parent=49 // loop_header
                  %s223 = sphi 0, %s225
                  %p224 = scmp.ge.s32.totalorder %s223, %s216
                  %s228 = sphi 0, %s237
                  %s229 = sphi %s219, %s240
                  %s230 = sphi %s221, %s241
                $region60: #{tpu_custom_call.1} parent=49 // loop_header_branch
                  %227 = sbr.rel (%p224) target = $region64
                $region61: #{tpu_custom_call.1} parent=49 // loop_body
                  %v231 = vld [vmem:[%s229] sm:$0xff]
                  %232 = vst [vmem:[%s230] sm:$0xff] %v231
                  %v233 = vld [vmem:[%s229 + $0x28] sm:$0xff]
                  %234 = vst [vmem:[%s230 + $0x20] sm:$0xff] %v233
                  %s235 = sadd.s32 1, %s228
                  %p236 = scmp.ge.s32.totalorder %s235, %s216
                  %s237 = scalar_select %p236, 0, %s235
                  %s238 = smul.u32 %s237, 8
                  %s239 = smul.u32 %s237, 8
                  %s240 = scalar_lea.vmem %s219, %s238
                  %s241 = scalar_lea.vmem %s221, %s239 [#allocation3]
                $region62: #{tpu_custom_call.1} parent=49 // loop_footer
                  %s225 = sadd.s32 %s223, 1
                $region63: #{tpu_custom_call.1} parent=49 // loop_footer_branch
                  %222 = sbr.rel target = $region59
                $region64: #{tpu_custom_call.1} parent=49 // loop_exit
                  _
              $region50: #{tpu_custom_call.1} parent=27 // pred_fallthru
                _
              // Predicated region
              $region65: #{tpu_custom_call.1} parent=27 // pred_check
                _
              $region66: #{tpu_custom_call.1} parent=27 // pred_check_branch
                %243 = sbr.rel target = $region68
              $region67: #{tpu_custom_call.1} parent=27 // pred_region
                _
              $region68: #{tpu_custom_call.1} parent=27 // pred_fallthru
                _
            $region28: #{tpu_custom_call.1} parent=23 // pred_fallthru
              _
            // Predicated region
            $region29: #{tpu_custom_call.1} parent=23 // pred_check
              _
            $region30: #{tpu_custom_call.1} parent=23 // pred_check_branch
              %117 = sbr.rel target = $region32
            $region31: #{tpu_custom_call.1} parent=23 // pred_region
              %s119 = ssub.s32 256, 1
              %s120 = sshrl.u32 %s106, 2
              // While loop
              $region33: #{tpu_custom_call.1} parent=31 // loop_pre_header
                _
              $region34: #{tpu_custom_call.1} parent=31 // loop_header
                %s122 = sphi 0, %s124
                %p123 = scmp.ge.s32.totalorder %s122, %s120
                %s127 = sphi 0, %s148
                %s128 = sphi %s110, %s151
                %s129 = sphi %s101, %s152
              $region35: #{tpu_custom_call.1} parent=31 // loop_header_branch
                %126 = sbr.rel (%p123) target = $region39
              $region36: #{tpu_custom_call.1} parent=31 // loop_body
                %v130 = vld [vmem:[%s128] sm:%s119]
                %131 = vst [vmem:[%s129] sm:%s119] %v130
                %v132 = vld [vmem:[%s128 + $0x8] sm:%s119]
                %133 = vst [vmem:[%s129 + $0x8] sm:%s119] %v132
                %v134 = vld [vmem:[%s128 + $0x10] sm:%s119]
                %135 = vst [vmem:[%s129 + $0x10] sm:%s119] %v134
                %v136 = vld [vmem:[%s128 + $0x18] sm:%s119]
                %137 = vst [vmem:[%s129 + $0x18] sm:%s119] %v136
                %v138 = vld [vmem:[%s128 + $0x28] sm:%s119]
                %139 = vst [vmem:[%s129 + $0x20] sm:%s119] %v138
                %v140 = vld [vmem:[%s128 + $0x30] sm:%s119]
                %141 = vst [vmem:[%s129 + $0x28] sm:%s119] %v140
                %v142 = vld [vmem:[%s128 + $0x38] sm:%s119]
                %143 = vst [vmem:[%s129 + $0x30] sm:%s119] %v142
                %v144 = vld [vmem:[%s128 + $0x40] sm:%s119]
                %145 = vst [vmem:[%s129 + $0x38] sm:%s119] %v144
                %s146 = sadd.s32 1, %s127
                %p147 = scmp.ge.s32.totalorder %s146, %s120
                %s148 = scalar_select %p147, 0, %s146
                %s149 = smul.u32 %s148, 32
                %s150 = smul.u32 %s148, 32
                %s151 = scalar_lea.vmem %s110, %s149
                %s152 = scalar_lea.vmem %s101, %s150 [#allocation3]
              $region37: #{tpu_custom_call.1} parent=31 // loop_footer
                %s124 = sadd.s32 %s122, 1
              $region38: #{tpu_custom_call.1} parent=31 // loop_footer_branch
                %121 = sbr.rel target = $region34
              $region39: #{tpu_custom_call.1} parent=31 // loop_exit
                _
              %s153 = sshrl.u32 %s106, 2
              %s154 = sand.u32 %s106, 3
              %s155 = smul.u32 %s153, 4
              %s156 = smul.u32 8, %s155
              %s157 = scalar_lea.vmem %s110, %s156
              %s158 = smul.u32 8, %s155
              %s159 = scalar_lea.vmem %s101, %s158 [#allocation3]
              // While loop
              $region40: #{tpu_custom_call.1} parent=31 // loop_pre_header
                _
              $region41: #{tpu_custom_call.1} parent=31 // loop_header
                %s161 = sphi 0, %s163
                %p162 = scmp.ge.s32.totalorder %s161, %s154
                %s166 = sphi 0, %s175
                %s167 = sphi %s157, %s178
                %s168 = sphi %s159, %s179
              $region42: #{tpu_custom_call.1} parent=31 // loop_header_branch
                %165 = sbr.rel (%p162) target = $region46
              $region43: #{tpu_custom_call.1} parent=31 // loop_body
                %v169 = vld [vmem:[%s167] sm:%s119]
                %170 = vst [vmem:[%s168] sm:%s119] %v169
                %v171 = vld [vmem:[%s167 + $0x28] sm:%s119]
                %172 = vst [vmem:[%s168 + $0x20] sm:%s119] %v171
                %s173 = sadd.s32 1, %s166
                %p174 = scmp.ge.s32.totalorder %s173, %s154
                %s175 = scalar_select %p174, 0, %s173
                %s176 = smul.u32 %s175, 8
                %s177 = smul.u32 %s175, 8
                %s178 = scalar_lea.vmem %s157, %s176
                %s179 = scalar_lea.vmem %s159, %s177 [#allocation3]
              $region44: #{tpu_custom_call.1} parent=31 // loop_footer
                %s163 = sadd.s32 %s161, 1
              $region45: #{tpu_custom_call.1} parent=31 // loop_footer_branch
                %160 = sbr.rel target = $region41
              $region46: #{tpu_custom_call.1} parent=31 // loop_exit
                _
            $region32: #{tpu_custom_call.1} parent=23 // pred_fallthru
              _
          $region24: #{tpu_custom_call.1} parent=19 // pred_fallthru
            _
          %244 = vnop
        $region20: #{tpu_custom_call.1} parent=15 // pred_fallthru
          _
      $region16: #{tpu_custom_call.1} parent=5 // pred_fallthru
        _
      %p245 = scmp.le.s32.totalorder 1, %s10
      %p246 = scmp.lt.s32.totalorder %s10, 3
      %p247 = pnand %p245, %p246
      %p248 = pneg %p247
      // Predicated region
      $region69: #{tpu_custom_call.1} parent=5 // pred_check
        _
      $region70: #{tpu_custom_call.1} parent=5 // pred_check_branch
        %250 = sbr.rel (%p247) target = $region72
      $region71: #{tpu_custom_call.1} parent=5 // pred_region
        %s251 = ssub.s32 %s10, 1
        %s252 = sand.u32 %s37, 1
        %s253 = sand.u32 %s37, 1
        %s254 = smul.addr %s253, 64
        %s255 = scalar_lea.vmem [#allocation3], %s254
        // Predicated region
        $region73: #{tpu_custom_call.1} parent=71 // pred_check
          %p256 = pneg %p50
        $region74: #{tpu_custom_call.1} parent=71 // pred_check_branch
          %258 = sbr.rel (%p256) target = $region76
        $region75: #{tpu_custom_call.1} parent=71 // pred_region
          _
        $region76: #{tpu_custom_call.1} parent=71 // pred_fallthru
          _
        %s259 = sand.u32 %s37, 1
        %s260 = sand.u32 %s37, 1
        %s261 = smul.addr %s260, 64
        %s262 = scalar_lea.vmem [#allocation3], %s261
        %p263 = pneg %p50
        %p264 = pneg %p47
        %p265 = pneg %p76
        %p266 = pneg %p73
        %s267 = sand.u32 %s63, 1
        %s268 = scalar_lea.sflag [#allocation5], %s267
        %s269 = sand.u32 %s63, 1
        %s270 = smul.addr %s269, 2
        %s271 = scalar_lea.vmem [#allocation4], %s270
        %s272 = sadd.s32 %s19, %s20
        %s273 = smul.u32 4, %s272
        %s274 = ssub.s32 5, %s273
        %p275 = scmp.lt.s32.totalorder %s274, 4
        %s276 = scalar_select %p275, %s274, 4
        %s277 = smul.u32 16, %s276
        %p278 = scmp.eq.s32.totalorder %s20, 0
        // Predicated region
        $region77: #{tpu_custom_call.1} parent=71 // pred_check
          %p279 = pneg %p278
        $region78: #{tpu_custom_call.1} parent=71 // pred_check_branch
          %281 = sbr.rel (%p279) target = $region80
        $region79: #{tpu_custom_call.1} parent=71 // pred_region
          %vm282 = vcmask 261120
          %283 = vst.msk [vmem:[#allocation2] sm:$0xff] %vm282, 0.0
          %284 = vst.msk [vmem:[#allocation2 + $0x8] sm:$0xff] %vm282, 0.0
          %285 = vst.msk [vmem:[#allocation2 + $0x10] sm:$0xff] %vm282, 0.0
          %286 = vst.msk [vmem:[#allocation2 + $0x18] sm:$0xff] %vm282, 0.0
        $region80: #{tpu_custom_call.1} parent=71 // pred_fallthru
          _
        %s287 = sadd.s32 %s19, %s20
        %s288 = smul.u32 %s287, 32
        %s289 = ssub.s32 40, %s288
        %p290 = scmp.ge.s32.totalorder %s289, 32
        // Predicated region
        $region81: #{tpu_custom_call.1} parent=71 // pred_check
          %p291 = pneg %p290
        $region82: #{tpu_custom_call.1} parent=71 // pred_check_branch
          %293 = sbr.rel (%p291) target = $region84
        $region83: #{tpu_custom_call.1} parent=71 // pred_region
          %v294 = vld [vmem:[%s255] sm:$0xff]
          %v295 = vld [vmem:[%s255 + $0x8] sm:$0xff]
          %v296 = vld [vmem:[%s255 + $0x20] sm:$0xff]
          %v297 = vld [vmem:[%s255 + $0x28] sm:$0xff]
          %v298 = vld [vmem:[%s255 + $0x10] sm:$0xff]
          %v299 = vld [vmem:[%s255 + $0x18] sm:$0xff]
          %v300 = vld [vmem:[%s255 + $0x30] sm:$0xff]
          %v301 = vld [vmem:[%s255 + $0x38] sm:$0xff]
          %v302 = vadd.f32 %v294, %v298
          %v303 = vadd.f32 %v295, %v299
          %v304 = vadd.f32 %v296, %v300
          %v305 = vadd.f32 %v297, %v301
          %v306 = vld [vmem:[#allocation2] sm:$0xff]
          %v307 = vld [vmem:[#allocation2 + $0x8] sm:$0xff]
          %v308 = vld [vmem:[#allocation2 + $0x10] sm:$0xff]
          %v309 = vld [vmem:[#allocation2 + $0x18] sm:$0xff]
          %v310 = vadd.f32 %v306, %v302
          %v311 = vadd.f32 %v307, %v303
          %v312 = vadd.f32 %v308, %v304
          %v313 = vadd.f32 %v309, %v305
          %vm314 = vcmask 261120
          %315 = vst.msk [vmem:[#allocation2] sm:$0xff] %vm314, %v310
          %316 = vst.msk [vmem:[#allocation2 + $0x8] sm:$0xff] %vm314, %v311
          %317 = vst.msk [vmem:[#allocation2 + $0x10] sm:$0xff] %vm314, %v312
          %318 = vst.msk [vmem:[#allocation2 + $0x18] sm:$0xff] %vm314, %v313
        $region84: #{tpu_custom_call.1} parent=71 // pred_fallthru
          _
        %p319 = scmp.gt.s32.totalorder %s289, 0
        %p320 = scmp.lt.s32.totalorder %s289, 32
        %p321 = pnand %p319, %p320
        %p322 = pneg %p321
        // Predicated region
        $region85: #{tpu_custom_call.1} parent=71 // pred_check
          _
        $region86: #{tpu_custom_call.1} parent=71 // pred_check_branch
          %324 = sbr.rel (%p321) target = $region88
        $region87: #{tpu_custom_call.1} parent=71 // pred_region
          %v325 = vld [vmem:[%s255] sm:$0xff]
          %v326 = vld [vmem:[%s255 + $0x8] sm:$0xff]
          %v327 = vld [vmem:[%s255 + $0x20] sm:$0xff]
          %v328 = vld [vmem:[%s255 + $0x28] sm:$0xff]
          %v329 = vlaneseq
          %v330 = vshrl.u32 %v329, 7
          %v331 = vadd.s32 %v330, 8
          %v332 = vstv %s289
          %vm333 = vcmp.lt.s32.totalorder %v330, %v332
          %vm334 = vcmp.lt.s32.totalorder %v331, %v332
          %v335 = vsel %vm333, %v325, 0.0
          %v336 = vsel %vm334, %v326, 0.0
          %v337 = vsel %vm333, %v327, 0.0
          %v338 = vsel %vm334, %v328, 0.0
          %v339 = vld [vmem:[%s255 + $0x10] sm:$0xff]
          %v340 = vld [vmem:[%s255 + $0x18] sm:$0xff]
          %v341 = vld [vmem:[%s255 + $0x30] sm:$0xff]
          %v342 = vld [vmem:[%s255 + $0x38] sm:$0xff]
          %v343 = vadd.s32 %v330, 16
          %v344 = vadd.s32 %v331, 16
          %vm345 = vcmp.lt.s32.totalorder %v343, %v332
          %vm346 = vcmp.lt.s32.totalorder %v344, %v332
          %v347 = vsel %vm345, %v339, 0.0
          %v348 = vsel %vm346, %v340, 0.0
          %v349 = vsel %vm345, %v341, 0.0
          %v350 = vsel %vm346, %v342, 0.0
          %v351 = vadd.f32 %v335, %v347
          %v352 = vadd.f32 %v336, %v348
          %v353 = vadd.f32 %v337, %v349
          %v354 = vadd.f32 %v338, %v350
          %v355 = vld [vmem:[#allocation2] sm:$0xff]
          %v356 = vld [vmem:[#allocation2 + $0x8] sm:$0xff]
          %v357 = vld [vmem:[#allocation2 + $0x10] sm:$0xff]
          %v358 = vld [vmem:[#allocation2 + $0x18] sm:$0xff]
          %v359 = vadd.f32 %v355, %v351
          %v360 = vadd.f32 %v356, %v352
          %v361 = vadd.f32 %v357, %v353
          %v362 = vadd.f32 %v358, %v354
          %vm363 = vcmask 261120
          %364 = vst.msk [vmem:[#allocation2] sm:$0xff] %vm363, %v359
          %365 = vst.msk [vmem:[#allocation2 + $0x8] sm:$0xff] %vm363, %v360
          %366 = vst.msk [vmem:[#allocation2 + $0x10] sm:$0xff] %vm363, %v361
          %367 = vst.msk [vmem:[#allocation2 + $0x18] sm:$0xff] %vm363, %v362
        $region88: #{tpu_custom_call.1} parent=71 // pred_fallthru
          _
        // Predicated region
        $region89: #{tpu_custom_call.1} parent=71 // pred_check
          %p368 = pneg %p278
        $region90: #{tpu_custom_call.1} parent=71 // pred_check_branch
          %370 = sbr.rel (%p368) target = $region92
        $region91: #{tpu_custom_call.1} parent=71 // pred_region
          %v371 = vld [vmem:[#allocation2] sm:$0xff]
          %v372 = vld [vmem:[#allocation2 + $0x8] sm:$0xff]
          %v373 = vld [vmem:[#allocation2 + $0x10] sm:$0xff]
          %v374 = vld [vmem:[#allocation2 + $0x18] sm:$0xff]
          %vm375 = vcmask 261120
          %v376 = vsel %vm375, %v371, 0.0
          %v377 = vsel %vm375, %v372, 0.0
          %v378 = vadd.f32 %v376, %v377
          %v379 = vrot.slane %v378, 4
          %v380 = vadd.f32 %v378, %v379
          %v381 = vrot.slane %v380, 2
          %v382 = vadd.f32 %v380, %v381
          %v383 = vrot.slane %v382, 1
          %v384 = vadd.f32 %v382, %v383
          %v385 = vsel %vm375, %v373, 0.0
          %v386 = vsel %vm375, %v374, 0.0
          %v387 = vadd.f32 %v385, %v386
          %v388 = vrot.slane %v387, 4
          %v389 = vadd.f32 %v387, %v388
          %v390 = vrot.slane %v389, 2
          %v391 = vadd.f32 %v389, %v390
          %v392 = vrot.slane %v391, 1
          %v393 = vadd.f32 %v391, %v392
          %vm396 = vcmask 1041409
          %v397 = vsel %vm396, %v393, %v384
          %vm399 = vcmask 254976
          %400 = vst.msk [vmem:[%s271] sm:$0x3] %vm399, %v397
        $region92: #{tpu_custom_call.1} parent=71 // pred_fallthru
          _
        %s401 = sand.u32 %s63, 1
        %s402 = scalar_lea.sflag [#allocation5], %s401
        %s403 = sand.u32 %s63, 1
        %s404 = smul.addr %s403, 2
        %s405 = scalar_lea.vmem [#allocation4], %s404
        // Predicated region
        $region93: #{tpu_custom_call.1} parent=71 // pred_check
          %p406 = pneg %p73
        $region94: #{tpu_custom_call.1} parent=71 // pred_check_branch
          %408 = sbr.rel (%p406) target = $region96
        $region95: #{tpu_custom_call.1} parent=71 // pred_region
          %410 = vsyncadd %s402, 0
          %s411 = smul.addr %s19, 2
          %s412 = scalar_lea.hbm %s1, %s411
          %s414 = sshll.u32 %s405, 4
          %s415 = int_to_ptr.vmem [resolvable:$true] %s414
          %s416 = sshll.u32 %s412, 4
          %s417 = int_to_ptr.hbm [resolvable:$true] %s416
          %419 = dma.vmem_to_hbm [thread:$0]  %s415, 32, %s417, %s402
        $region96: #{tpu_custom_call.1} parent=71 // pred_fallthru
          _
      $region72: #{tpu_custom_call.1} parent=5 // pred_fallthru
        _
      %p420 = scmp.le.s32.totalorder 2, %s10
      // Predicated region
      $region97: #{tpu_custom_call.1} parent=5 // pred_check
        %p421 = pneg %p420
      $region98: #{tpu_custom_call.1} parent=5 // pred_check_branch
        %423 = sbr.rel (%p421) target = $region100
      $region99: #{tpu_custom_call.1} parent=5 // pred_region
        %s424 = ssub.s32 %s10, 2
        // Predicated region
        $region101: #{tpu_custom_call.1} parent=99 // pred_check
          %p425 = pneg %p79
        $region102: #{tpu_custom_call.1} parent=99 // pred_check_branch
          %427 = sbr.rel (%p425) target = $region104
        $region103: #{tpu_custom_call.1} parent=99 // pred_region
          %s428 = sand.u32 %s64, 1
          %s429 = scalar_lea.sflag [#allocation5], %s428
          %s430 = sand.u32 %s64, 1
          %s431 = smul.addr %s430, 2
          %s432 = scalar_lea.vmem [#allocation4], %s431
          %434 = dma.done %s429, 32
        $region104: #{tpu_custom_call.1} parent=99 // pred_fallthru
          _
      $region100: #{tpu_custom_call.1} parent=5 // pred_fallthru
        _
    $region6: #{tpu_custom_call.1} parent=1 // loop_footer
      %s14 = sadd.s32 1, %s10
    $region7: #{tpu_custom_call.1} parent=1 // loop_footer_branch
      %9 = sbr.rel target = $region3
    $region8: #{tpu_custom_call.1} parent=1 // loop_exit
      _
    %435 = vsyncpa [#allocation5], 1
    %s436 = scalar_lea.sflag [#allocation5], 1
    %437 = vsyncpa %s436, 1

</llo_original>
